<compile_context>
chip_gen: v7x
topology: tpu7x:2x2x1
jax: 0.10.0
libtpu: 0.0.40
codegen_flags: <defaults>
</compile_context>

<pallas_src>
import jax
import jax.numpy as jnp
from jax.experimental import pallas as pl
from jax.experimental.pallas import tpu as pltpu


def _round_up(x, m):
    return ((x + m - 1) // m) * m


def _fused_kernel(uid_ref, iid_ref, emb_u_ref, emb_i_ref,
                  wfc_u_ref, wfc_i_ref, bfc_ref, wout_h_ref, bout_ref, out_ref):
    # uid_ref, iid_ref: (TB, 1) int32   -- user / item ids for this batch tile
    # emb_u_ref: (n_users, H) f32       -- VMEM-resident embedding table
    # emb_i_ref: (n_items, H) f32       -- VMEM-resident embedding table
    # wfc_u_ref: (H, H+1) f32           -- fc rows acting on u; extra col = w_out[:H]
    # wfc_i_ref: (H, H+1) f32           -- fc rows acting on i; extra col = w_out[H:2H]
    # bfc_ref:   (1, H+1) f32           -- fc bias, last entry 0
    # wout_h_ref:(1, H)   f32           -- output weights on the relu features
    # bout_ref:  (1,)     f32 (SMEM)    -- output bias
    # out_ref:   (TB, 1)  f32           -- sigmoid outputs
    tb = uid_ref.shape[0]
    n_users, H = emb_u_ref.shape
    n_items = emb_i_ref.shape[0]

    # Embedding gather as one-hot matmuls on the MXU (tables are VMEM-resident).
    oh_u = (uid_ref[...] ==
            jax.lax.broadcasted_iota(jnp.int32, (tb, n_users), 1)).astype(jnp.float32)
    oh_i = (iid_ref[...] ==
            jax.lax.broadcasted_iota(jnp.int32, (tb, n_items), 1)).astype(jnp.float32)
    u = jnp.dot(oh_u, emb_u_ref[...], preferred_element_type=jnp.float32)   # (TB, H)
    iv = jnp.dot(oh_i, emb_i_ref[...], preferred_element_type=jnp.float32)  # (TB, H)

    # fc layer with the [u, i] part of output_fc folded in as an extra column.
    h_ext = (jnp.dot(u, wfc_u_ref[...], preferred_element_type=jnp.float32)
             + jnp.dot(iv, wfc_i_ref[...], preferred_element_type=jnp.float32)
             + bfc_ref[...])                                   # (TB, H+1)
    h = jnp.maximum(h_ext[:, :H], 0.0)                         # relu(fc(cat[u,i]))
    t_ui = h_ext[:, H:]                                        # cat[u,i] @ w_out[:2H]
    # F.dropout(..., training=False) is the identity in eval mode.

    logits = (t_ui
              + jnp.sum(h * wout_h_ref[...], axis=-1, keepdims=True)
              + bout_ref[0])                                   # (TB, 1)
    out_ref[...] = jax.nn.sigmoid(logits)


def _jax_forward(users, items, params, *, scale=None):
    """Plain-XLA forward (reference + large-vocab fallback)."""
    u = jnp.take(params["emb_u"], users, axis=0)
    iv = jnp.take(params["emb_i"], items, axis=0)
    feats = jnp.concatenate([u, iv], axis=1)
    h = jnp.maximum(feats @ params["w_fc"] + params["b_fc"][None, :], 0.0)
    full = jnp.concatenate([feats, h], axis=1)
    logits = full @ params["w_out"][:, None] + params["b_out"][None, :]
    out = jax.nn.sigmoid(logits)
    if scale is not None:
        out = out * scale
    return out


def test_model_forward(users, items, params, *, scale=None, block_batch=2048,
                       onehot_max_ids=1024):
    """users, items: int (B,).  Returns (B, 1) float32 sigmoid outputs."""
    emb_u, emb_i = params["emb_u"], params["emb_i"]
    n_users, H = emb_u.shape
    n_items = emb_i.shape[0]
    B = users.shape[0]

    if max(n_users, n_items) > onehot_max_ids:
        # TODO(synk): large-vocab path — per-tile DMA gather of embedding rows
        # from HBM (PrefetchScalarGridSpec + pltpu.make_async_copy) instead of
        # the one-hot MXU gather; fall back to plain XLA for now.
        return _jax_forward(users, items, params, scale=scale)

    # Fold the [u, i] rows of output_fc into W_fc as one extra output column.
    w_fc, w_out = params["w_fc"], params["w_out"]
    wfc_u_ext = jnp.concatenate([w_fc[:H, :], w_out[:H, None]], axis=1)        # (H, H+1)
    wfc_i_ext = jnp.concatenate([w_fc[H:, :], w_out[H:2 * H, None]], axis=1)   # (H, H+1)
    bfc_ext = jnp.concatenate(
        [params["b_fc"], jnp.zeros((1,), jnp.float32)])[None, :]               # (1, H+1)
    wout_h = w_out[2 * H:][None, :]                                            # (1, H)

    # Batch tile: multiple of 128, >= 2 tiles when B is large enough (v7x
    # megacore), capped to bound per-step VMEM while amortizing grid overhead.
    tb = min(block_batch, _round_up(pl.cdiv(max(B, 1), 2), 128))
    num_tiles = pl.cdiv(B, tb)
    b_pad = num_tiles * tb

    users_p = jnp.pad(users.astype(jnp.int32), (0, b_pad - B)).reshape(b_pad, 1)
    items_p = jnp.pad(items.astype(jnp.int32), (0, b_pad - B)).reshape(b_pad, 1)

    def resident(shape):  # weight / table blocks stay VMEM-resident across steps
        return pl.BlockSpec(shape, lambda b: (0, 0))

    flops = int(2 * b_pad * H * (n_users + n_items + 2 * (H + 1)) + 6 * b_pad * H)
    bytes_accessed = int(
        b_pad * (4 + 4 + 4)
        + 4 * (n_users * H + n_items * H + 2 * H * (H + 1) + (H + 1) + H + 1))
    cost = pl.CostEstimate(flops=flops, transcendentals=int(b_pad),
                           bytes_accessed=bytes_accessed)

    out = pl.pallas_call(
        _fused_kernel,
        out_shape=jax.ShapeDtypeStruct((b_pad, 1), jnp.float32),
        grid=(num_tiles,),
        in_specs=[
            pl.BlockSpec((tb, 1), lambda b: (b, 0)),            # user ids tile
            pl.BlockSpec((tb, 1), lambda b: (b, 0)),            # item ids tile
            resident((n_users, H)),                             # Emb_u
            resident((n_items, H)),                             # Emb_i
            resident((H, H + 1)),                               # W_fc (u rows) + w_out_u col
            resident((H, H + 1)),                               # W_fc (i rows) + w_out_i col
            resident((1, H + 1)),                               # b_fc (ext)
            resident((1, H)),                                   # w_out rows on relu feats
            pl.BlockSpec(memory_space=pltpu.MemorySpace.SMEM),  # b_out scalar
        ],
        out_specs=pl.BlockSpec((tb, 1), lambda b: (b, 0)),
        compiler_params=pltpu.CompilerParams(
            dimension_semantics=("parallel",),
        ),
        cost_estimate=cost,
    )(users_p, items_p, emb_u, emb_i, wfc_u_ext, wfc_i_ext, bfc_ext, wout_h,
      params["b_out"])

    out = out[:B]
    if scale is not None:
        out = out * scale
    return out


def init_params(key, n_users, n_items, hidden_dims):
    """PyTorch-like init: Embedding ~ N(0,1); Linear ~ U(-1/sqrt(fan_in), ...)."""
    k = jax.random.split(key, 6)
    H = hidden_dims
    lim_fc = 1.0 / jnp.sqrt(2.0 * H)
    lim_out = 1.0 / jnp.sqrt(3.0 * H)
    return {
        "emb_u": jax.random.normal(k[0], (n_users, H), jnp.float32),
        "emb_i": jax.random.normal(k[1], (n_items, H), jnp.float32),
        "w_fc": jax.random.uniform(k[2], (2 * H, H), jnp.float32, -lim_fc, lim_fc),
        "b_fc": jax.random.uniform(k[3], (H,), jnp.float32, -lim_fc, lim_fc),
        "w_out": jax.random.uniform(k[4], (3 * H,), jnp.float32, -lim_out, lim_out),
        "b_out": jax.random.uniform(k[5], (1,), jnp.float32, -lim_out, lim_out),
    }


if __name__ == "__main__":
    n_users, n_items, hidden_dims = 64, 128, 32
    batch = 8

    key = jax.random.PRNGKey(0)
    kp, ku, ki = jax.random.split(key, 3)
    params = init_params(kp, n_users, n_items, hidden_dims)

    users = jax.random.randint(ku, (batch,), 0, n_users, dtype=jnp.int32)
    items = jax.random.randint(ki, (batch,), 0, n_items, dtype=jnp.int32)

    out = test_model_forward(users, items, params)
    out = jax.block_until_ready(out)

    ref = _jax_forward(users, items, params)
    assert out.shape == (batch, 1), out.shape
    # Tolerance leaves headroom for MXU f32 matmul pass behaviour across TPU gens.
    assert jnp.allclose(out, ref, atol=2e-3, rtol=2e-3), (out, ref)
    print("KERNEL_OK")
</pallas_src>

<mosaic_0001>
module attributes {stable_mosaic.version = 11 : i64} {
  func.func @_fused_kernel(%arg0: i32, %arg1: memref<128x1xi32, #tpu.memory_space<vmem>>, %arg2: memref<128x1xi32, #tpu.memory_space<vmem>>, %arg3: memref<64x32xf32, #tpu.memory_space<vmem>>, %arg4: memref<128x32xf32, #tpu.memory_space<vmem>>, %arg5: memref<32x33xf32, #tpu.memory_space<vmem>>, %arg6: memref<32x33xf32, #tpu.memory_space<vmem>>, %arg7: memref<1x33xf32, #tpu.memory_space<vmem>>, %arg8: memref<1x32xf32, #tpu.memory_space<vmem>>, %arg9: memref<1xf32, #tpu.memory_space<smem>>, %arg10: memref<128x1xf32, #tpu.memory_space<vmem>>) attributes {dimension_semantics = [#tpu.dimension_semantics<parallel>], iteration_bounds = array<i64: 1>, scalar_prefetch = 0 : i64, scratch_operands = 0 : i64, tpu.core_type = #tpu.core_type<tc>, window_params = [{transform_indices = @transform_0, window_bounds = array<i64: 128, 1>}, {transform_indices = @transform_1, window_bounds = array<i64: 128, 1>}, {pipeline_mode = #tpu.pipeline_mode<synchronous>, transform_indices = @transform_2, window_bounds = array<i64: 64, 32>}, {pipeline_mode = #tpu.pipeline_mode<synchronous>, transform_indices = @transform_3, window_bounds = array<i64: 128, 32>}, {pipeline_mode = #tpu.pipeline_mode<synchronous>, transform_indices = @transform_4, window_bounds = array<i64: 32, 33>}, {pipeline_mode = #tpu.pipeline_mode<synchronous>, transform_indices = @transform_5, window_bounds = array<i64: 32, 33>}, {pipeline_mode = #tpu.pipeline_mode<synchronous>, transform_indices = @transform_6, window_bounds = array<i64: 1, 33>}, {pipeline_mode = #tpu.pipeline_mode<synchronous>, transform_indices = @transform_7, window_bounds = array<i64: 1, 32>}, {transform_indices = @transform_8, window_bounds = array<i64: 1>}, {transform_indices = @transform_9, window_bounds = array<i64: 128, 1>}]} {
    %c0 = arith.constant 0 : index
    %c0_0 = arith.constant 0 : index
    %0 = vector.load %arg1[%c0, %c0_0] : memref<128x1xi32, #tpu.memory_space<vmem>>, vector<128x1xi32>
    %1 = tpu.iota {dimensions = array<i32: 1>} : vector<128x64xi32>
    %2 = vector.broadcast %0 : vector<128x1xi32> to vector<128x64xi32>
    %3 = arith.cmpi eq, %2, %1 : vector<128x64xi32>
    %4 = arith.extui %3 : vector<128x64xi1> to vector<128x64xi32>
    %5 = arith.sitofp %4 : vector<128x64xi32> to vector<128x64xf32>
    %c0_1 = arith.constant 0 : index
    %c0_2 = arith.constant 0 : index
    %6 = vector.load %arg2[%c0_1, %c0_2] : memref<128x1xi32, #tpu.memory_space<vmem>>, vector<128x1xi32>
    %7 = tpu.iota {dimensions = array<i32: 1>} : vector<128x128xi32>
    %8 = vector.broadcast %6 : vector<128x1xi32> to vector<128x128xi32>
    %9 = arith.cmpi eq, %8, %7 : vector<128x128xi32>
    %10 = arith.extui %9 : vector<128x128xi1> to vector<128x128xi32>
    %11 = arith.sitofp %10 : vector<128x128xi32> to vector<128x128xf32>
    %c0_3 = arith.constant 0 : index
    %c0_4 = arith.constant 0 : index
    %12 = vector.load %arg3[%c0_3, %c0_4] : memref<64x32xf32, #tpu.memory_space<vmem>>, vector<64x32xf32>
    %cst = arith.constant dense<0.000000e+00> : vector<128x32xf32>
    %13 = tpu.matmul %5, %12, %cst {dimension_numbers = #tpu.dot_dimension_numbers<[1], [0], [0], [1], [0, 0, 1, 1], [], []>} : vector<128x64xf32>, vector<64x32xf32>, vector<128x32xf32> -> vector<128x32xf32>
    %c0_5 = arith.constant 0 : index
    %c0_6 = arith.constant 0 : index
    %14 = vector.load %arg4[%c0_5, %c0_6] : memref<128x32xf32, #tpu.memory_space<vmem>>, vector<128x32xf32>
    %cst_7 = arith.constant dense<0.000000e+00> : vector<128x32xf32>
    %15 = tpu.matmul %11, %14, %cst_7 {dimension_numbers = #tpu.dot_dimension_numbers<[1], [0], [0], [1], [0, 0, 1, 1], [], []>} : vector<128x128xf32>, vector<128x32xf32>, vector<128x32xf32> -> vector<128x32xf32>
    %c0_8 = arith.constant 0 : index
    %c0_9 = arith.constant 0 : index
    %16 = vector.load %arg5[%c0_8, %c0_9] : memref<32x33xf32, #tpu.memory_space<vmem>>, vector<32x33xf32>
    %cst_10 = arith.constant dense<0.000000e+00> : vector<128x33xf32>
    %17 = tpu.matmul %13, %16, %cst_10 {dimension_numbers = #tpu.dot_dimension_numbers<[1], [0], [0], [1], [0, 0, 1, 1], [], []>} : vector<128x32xf32>, vector<32x33xf32>, vector<128x33xf32> -> vector<128x33xf32>
    %c0_11 = arith.constant 0 : index
    %c0_12 = arith.constant 0 : index
    %18 = vector.load %arg6[%c0_11, %c0_12] : memref<32x33xf32, #tpu.memory_space<vmem>>, vector<32x33xf32>
    %cst_13 = arith.constant dense<0.000000e+00> : vector<128x33xf32>
    %19 = tpu.matmul %15, %18, %cst_13 {dimension_numbers = #tpu.dot_dimension_numbers<[1], [0], [0], [1], [0, 0, 1, 1], [], []>} : vector<128x32xf32>, vector<32x33xf32>, vector<128x33xf32> -> vector<128x33xf32>
    %20 = arith.addf %17, %19 : vector<128x33xf32>
    %c0_14 = arith.constant 0 : index
    %c0_15 = arith.constant 0 : index
    %21 = vector.load %arg7[%c0_14, %c0_15] : memref<1x33xf32, #tpu.memory_space<vmem>>, vector<1x33xf32>
    %22 = vector.broadcast %21 : vector<1x33xf32> to vector<128x33xf32>
    %23 = arith.addf %20, %22 : vector<128x33xf32>
    %24 = vector.extract_strided_slice %23 {offsets = [0, 0], sizes = [128, 32], strides = [1, 1]} : vector<128x33xf32> to vector<128x32xf32>
    %cst_16 = arith.constant 0.000000e+00 : f32
    %25 = vector.broadcast %cst_16 : f32 to vector<128x32xf32>
    %26 = arith.maximumf %24, %25 : vector<128x32xf32>
    %27 = vector.extract_strided_slice %23 {offsets = [0, 32], sizes = [128, 1], strides = [1, 1]} : vector<128x33xf32> to vector<128x1xf32>
    %c0_17 = arith.constant 0 : index
    %c0_18 = arith.constant 0 : index
    %28 = vector.load %arg8[%c0_17, %c0_18] : memref<1x32xf32, #tpu.memory_space<vmem>>, vector<1x32xf32>
    %29 = vector.broadcast %28 : vector<1x32xf32> to vector<128x32xf32>
    %30 = arith.mulf %26, %29 : vector<128x32xf32>
    %cst_19 = arith.constant dense<0.000000e+00> : vector<128xf32>
    %31 = vector.multi_reduction <add>, %30, %cst_19 [1] : vector<128x32xf32> to vector<128xf32>
    %32 = vector.shape_cast %31 : vector<128xf32> to vector<128x1xf32>
    %33 = arith.addf %27, %32 : vector<128x1xf32>
    %c0_20 = arith.constant 0 : index
    %34 = memref.load %arg9[%c0_20] : memref<1xf32, #tpu.memory_space<smem>>
    %35 = vector.broadcast %34 : f32 to vector<128x1xf32>
    %36 = arith.addf %33, %35 : vector<128x1xf32>
    %37 = arith.negf %36 : vector<128x1xf32>
    %38 = math.exp %37 : vector<128x1xf32>
    %cst_21 = arith.constant 1.000000e+00 : f32
    %39 = vector.broadcast %cst_21 : f32 to vector<128x1xf32>
    %40 = arith.addf %39, %38 : vector<128x1xf32>
    %41 = arith.divf %39, %40 : vector<128x1xf32>
    %c0_22 = arith.constant 0 : index
    %c0_23 = arith.constant 0 : index
    %42 = vector.load %arg10[%c0_22, %c0_23] : memref<128x1xf32, #tpu.memory_space<vmem>>, vector<128x1xf32>
    tpu.vector_store %arg10[%c0_22, %c0_23], %41 {strides = array<i32>} : memref<128x1xf32, #tpu.memory_space<vmem>>, vector<128x1xf32>,
    return
  }
  func.func @transform_0(%arg0: i32) -> (i32, i32) {
    %c0_i32 = arith.constant 0 : i32
    %c0_i32_0 = arith.constant 0 : i32
    return %arg0, %c0_i32 : i32, i32
  }
  func.func @transform_1(%arg0: i32) -> (i32, i32) {
    %c0_i32 = arith.constant 0 : i32
    %c0_i32_0 = arith.constant 0 : i32
    return %arg0, %c0_i32 : i32, i32
  }
  func.func @transform_2(%arg0: i32) -> (i32, i32) {
    %c0_i32 = arith.constant 0 : i32
    %c0_i32_0 = arith.constant 0 : i32
    %c0_i32_1 = arith.constant 0 : i32
    return %c0_i32, %c0_i32_0 : i32, i32
  }
  func.func @transform_3(%arg0: i32) -> (i32, i32) {
    %c0_i32 = arith.constant 0 : i32
    %c0_i32_0 = arith.constant 0 : i32
    %c0_i32_1 = arith.constant 0 : i32
    return %c0_i32, %c0_i32_0 : i32, i32
  }
  func.func @transform_4(%arg0: i32) -> (i32, i32) {
    %c0_i32 = arith.constant 0 : i32
    %c0_i32_0 = arith.constant 0 : i32
    %c0_i32_1 = arith.constant 0 : i32
    return %c0_i32, %c0_i32_0 : i32, i32
  }
  func.func @transform_5(%arg0: i32) -> (i32, i32) {
    %c0_i32 = arith.constant 0 : i32
    %c0_i32_0 = arith.constant 0 : i32
    %c0_i32_1 = arith.constant 0 : i32
    return %c0_i32, %c0_i32_0 : i32, i32
  }
  func.func @transform_6(%arg0: i32) -> (i32, i32) {
    %c0_i32 = arith.constant 0 : i32
    %c0_i32_0 = arith.constant 0 : i32
    %c0_i32_1 = arith.constant 0 : i32
    return %c0_i32, %c0_i32_0 : i32, i32
  }
  func.func @transform_7(%arg0: i32) -> (i32, i32) {
    %c0_i32 = arith.constant 0 : i32
    %c0_i32_0 = arith.constant 0 : i32
    %c0_i32_1 = arith.constant 0 : i32
    return %c0_i32, %c0_i32_0 : i32, i32
  }
  func.func @transform_8(%arg0: i32) -> i32 {
    %c0_i32 = arith.constant 0 : i32
    %c0_i32_0 = arith.constant 0 : i32
    return %c0_i32 : i32
  }
  func.func @transform_9(%arg0: i32) -> (i32, i32) {
    %c0_i32 = arith.constant 0 : i32
    %c0_i32_0 = arith.constant 0 : i32
    return %arg0, %c0_i32 : i32, i32
  }
}

</mosaic_0001>

<llo_original>
// kernel: tpu_custom_call.1
$region0: #{tpu_custom_call.1}
  #allocation0 [shape = 'u32[]', space=smem, size = 0x4, offset = 0x4, fixed_abs, tag = 'smem constant byte address 0x4 - core index']
  #allocation1 [shape = 'u32[144,128]{1,0:T(1,128)}', space=vmem, size = 0x12000, scoped, tag = 'internal scratch']
  #allocation2 [shape = 'f32[1]{0:T(128)S(6)}', space=smem, size = 0x200, scoped, tag = 'scoped memory for tpu_custom_call.1']
  %s0 = inlined_call_operand.vmem [shape: s32[128,1], index: 0, kind: input, shape index: {}]
  %s1 = inlined_call_operand.vmem [shape: s32[128,1], index: 1, kind: input, shape index: {}]
  %s2 = inlined_call_operand.vmem [shape: f32[64,32], index: 2, kind: input, shape index: {}]
  %s3 = inlined_call_operand.vmem [shape: f32[128,32], index: 3, kind: input, shape index: {}]
  %s4 = inlined_call_operand.vmem [shape: f32[32,33], index: 4, kind: input, shape index: {}]
  %s5 = inlined_call_operand.vmem [shape: f32[32,33], index: 5, kind: input, shape index: {}]
  %s6 = inlined_call_operand.vmem [shape: f32[1,33], index: 6, kind: input, shape index: {}]
  %s7 = inlined_call_operand.vmem [shape: f32[1,32], index: 7, kind: input, shape index: {}]
  %s8 = inlined_call_operand.<no memory space> [shape: f32[1], index: 8, kind: input, shape index: {}]
  %s9 = inlined_call_operand.vmem [shape: f32[128,1], index: 9, kind: output, shape index: {}]
  %s10 = sld [smem:[#allocation0]]
  $region46: #{tpu_custom_call.1} parent=0
    _
  %s12 = ssub.s32 1, %s10
  %s13 = scalar_select 0, %s12, %s10
  %14 = sst [smem:[#allocation2]] %s8
  // Predicated region
  $region2: #{tpu_custom_call.1} parent=0 // pred_check
    _
  $region3: #{tpu_custom_call.1} parent=0 // pred_check_branch
    %16 = sbr.rel (0) target = $region5
  $region4: #{tpu_custom_call.1} parent=0 // pred_region
    _
  $region5: #{tpu_custom_call.1} parent=0 // pred_fallthru
    _
  // Predicated region
  $region6: #{tpu_custom_call.1} parent=0 // pred_check
    _
  $region7: #{tpu_custom_call.1} parent=0 // pred_check_branch
    %18 = sbr.rel (0) target = $region9
  $region8: #{tpu_custom_call.1} parent=0 // pred_region
    _
  $region9: #{tpu_custom_call.1} parent=0 // pred_fallthru
    _
  // Predicated region
  $region10: #{tpu_custom_call.1} parent=0 // pred_check
    _
  $region11: #{tpu_custom_call.1} parent=0 // pred_check_branch
    %20 = sbr.rel (0) target = $region13
  $region12: #{tpu_custom_call.1} parent=0 // pred_region
    _
  $region13: #{tpu_custom_call.1} parent=0 // pred_fallthru
    _
  // Predicated region
  $region14: #{tpu_custom_call.1} parent=0 // pred_check
    _
  $region15: #{tpu_custom_call.1} parent=0 // pred_check_branch
    %22 = sbr.rel (0) target = $region17
  $region16: #{tpu_custom_call.1} parent=0 // pred_region
    _
  $region17: #{tpu_custom_call.1} parent=0 // pred_fallthru
    _
  // Predicated region
  $region18: #{tpu_custom_call.1} parent=0 // pred_check
    _
  $region19: #{tpu_custom_call.1} parent=0 // pred_check_branch
    %24 = sbr.rel (0) target = $region21
  $region20: #{tpu_custom_call.1} parent=0 // pred_region
    _
  $region21: #{tpu_custom_call.1} parent=0 // pred_fallthru
    _
  // Predicated region
  $region22: #{tpu_custom_call.1} parent=0 // pred_check
    _
  $region23: #{tpu_custom_call.1} parent=0 // pred_check_branch
    %26 = sbr.rel (0) target = $region25
  $region24: #{tpu_custom_call.1} parent=0 // pred_region
    _
  $region25: #{tpu_custom_call.1} parent=0 // pred_fallthru
    _
  // Predicated region
  $region26: #{tpu_custom_call.1} parent=0 // pred_check
    _
  $region27: #{tpu_custom_call.1} parent=0 // pred_check_branch
    %28 = sbr.rel (0) target = $region29
  $region28: #{tpu_custom_call.1} parent=0 // pred_region
    _
  $region29: #{tpu_custom_call.1} parent=0 // pred_fallthru
    _
  // Predicated region
  $region30: #{tpu_custom_call.1} parent=0 // pred_check
    _
  $region31: #{tpu_custom_call.1} parent=0 // pred_check_branch
    %30 = sbr.rel (0) target = $region33
  $region32: #{tpu_custom_call.1} parent=0 // pred_region
    _
  $region33: #{tpu_custom_call.1} parent=0 // pred_fallthru
    _
  // Predicated region
  $region34: #{tpu_custom_call.1} parent=0 // pred_check
    _
  $region35: #{tpu_custom_call.1} parent=0 // pred_check_branch
    %32 = sbr.rel (0) target = $region37
  $region36: #{tpu_custom_call.1} parent=0 // pred_region
    _
  $region37: #{tpu_custom_call.1} parent=0 // pred_fallthru
    _
  %v33 = vld [vmem:[%s0] sm:$0xff]
  %v34 = vld [vmem:[%s0 + $0x8] sm:$0xff]
  %v35 = vld [vmem:[%s0 + $0x10] sm:$0xff]
  %v36 = vld [vmem:[%s0 + $0x18] sm:$0xff]
  %v37 = vld [vmem:[%s0 + $0x20] sm:$0xff]
  %v38 = vld [vmem:[%s0 + $0x28] sm:$0xff]
  %v39 = vld [vmem:[%s0 + $0x30] sm:$0xff]
  %v40 = vld [vmem:[%s0 + $0x38] sm:$0xff]
  %v41 = vld [vmem:[%s0 + $0x40] sm:$0xff]
  %v42 = vld [vmem:[%s0 + $0x48] sm:$0xff]
  %v43 = vld [vmem:[%s0 + $0x50] sm:$0xff]
  %v44 = vld [vmem:[%s0 + $0x58] sm:$0xff]
  %v45 = vld [vmem:[%s0 + $0x60] sm:$0xff]
  %v46 = vld [vmem:[%s0 + $0x68] sm:$0xff]
  %v47 = vld [vmem:[%s0 + $0x70] sm:$0xff]
  %v48 = vld [vmem:[%s0 + $0x78] sm:$0xff]
  %v49 = vlaneseq
  %v50 = vand.u32 %v49, 127
  %51 = vset.pattern.permute.xlu0 0
  %52 = vperm.xlu0 %51, %v33
  %v53 = vpop.permute.xlu0 %52
  %54 = vset.pattern.permute.xlu0 0
  %55 = vperm.xlu0 %54, %v34
  %v56 = vpop.permute.xlu0 %55
  %57 = vset.pattern.permute.xlu0 0
  %58 = vperm.xlu0 %57, %v35
  %v59 = vpop.permute.xlu0 %58
  %60 = vset.pattern.permute.xlu0 0
  %61 = vperm.xlu0 %60, %v36
  %v62 = vpop.permute.xlu0 %61
  %63 = vset.pattern.permute.xlu0 0
  %64 = vperm.xlu0 %63, %v37
  %v65 = vpop.permute.xlu0 %64
  %66 = vset.pattern.permute.xlu0 0
  %67 = vperm.xlu0 %66, %v38
  %v68 = vpop.permute.xlu0 %67
  %69 = vset.pattern.permute.xlu0 0
  %70 = vperm.xlu0 %69, %v39
  %v71 = vpop.permute.xlu0 %70
  %72 = vset.pattern.permute.xlu0 0
  %73 = vperm.xlu0 %72, %v40
  %v74 = vpop.permute.xlu0 %73
  %75 = vset.pattern.permute.xlu0 0
  %76 = vperm.xlu0 %75, %v41
  %v77 = vpop.permute.xlu0 %76
  %78 = vset.pattern.permute.xlu0 0
  %79 = vperm.xlu0 %78, %v42
  %v80 = vpop.permute.xlu0 %79
  %81 = vset.pattern.permute.xlu0 0
  %82 = vperm.xlu0 %81, %v43
  %v83 = vpop.permute.xlu0 %82
  %84 = vset.pattern.permute.xlu0 0
  %85 = vperm.xlu0 %84, %v44
  %v86 = vpop.permute.xlu0 %85
  %87 = vset.pattern.permute.xlu0 0
  %88 = vperm.xlu0 %87, %v45
  %v89 = vpop.permute.xlu0 %88
  %90 = vset.pattern.permute.xlu0 0
  %91 = vperm.xlu0 %90, %v46
  %v92 = vpop.permute.xlu0 %91
  %93 = vset.pattern.permute.xlu0 0
  %94 = vperm.xlu0 %93, %v47
  %v95 = vpop.permute.xlu0 %94
  %96 = vset.pattern.permute.xlu0 0
  %97 = vperm.xlu0 %96, %v48
  %v98 = vpop.permute.xlu0 %97
  %vm99 = vcmp.eq.s32.totalorder %v53, %v50
  %vm100 = vcmp.eq.s32.totalorder %v56, %v50
  %vm101 = vcmp.eq.s32.totalorder %v59, %v50
  %vm102 = vcmp.eq.s32.totalorder %v62, %v50
  %vm103 = vcmp.eq.s32.totalorder %v65, %v50
  %vm104 = vcmp.eq.s32.totalorder %v68, %v50
  %vm105 = vcmp.eq.s32.totalorder %v71, %v50
  %vm106 = vcmp.eq.s32.totalorder %v74, %v50
  %vm107 = vcmp.eq.s32.totalorder %v77, %v50
  %vm108 = vcmp.eq.s32.totalorder %v80, %v50
  %vm109 = vcmp.eq.s32.totalorder %v83, %v50
  %vm110 = vcmp.eq.s32.totalorder %v86, %v50
  %vm111 = vcmp.eq.s32.totalorder %v89, %v50
  %vm112 = vcmp.eq.s32.totalorder %v92, %v50
  %vm113 = vcmp.eq.s32.totalorder %v95, %v50
  %vm114 = vcmp.eq.s32.totalorder %v98, %v50
  %v115 = vsel %vm99, 1, 0
  %v116 = vsel %vm100, 1, 0
  %v117 = vsel %vm101, 1, 0
  %v118 = vsel %vm102, 1, 0
  %v119 = vsel %vm103, 1, 0
  %v120 = vsel %vm104, 1, 0
  %v121 = vsel %vm105, 1, 0
  %v122 = vsel %vm106, 1, 0
  %v123 = vsel %vm107, 1, 0
  %v124 = vsel %vm108, 1, 0
  %v125 = vsel %vm109, 1, 0
  %v126 = vsel %vm110, 1, 0
  %v127 = vsel %vm111, 1, 0
  %v128 = vsel %vm112, 1, 0
  %v129 = vsel %vm113, 1, 0
  %v130 = vsel %vm114, 1, 0
  %v131 = vcvt.s32.f32 %v115
  %v132 = vcvt.s32.f32 %v116
  %v133 = vcvt.s32.f32 %v117
  %v134 = vcvt.s32.f32 %v118
  %v135 = vcvt.s32.f32 %v119
  %v136 = vcvt.s32.f32 %v120
  %v137 = vcvt.s32.f32 %v121
  %v138 = vcvt.s32.f32 %v122
  %v139 = vcvt.s32.f32 %v123
  %v140 = vcvt.s32.f32 %v124
  %v141 = vcvt.s32.f32 %v125
  %v142 = vcvt.s32.f32 %v126
  %v143 = vcvt.s32.f32 %v127
  %v144 = vcvt.s32.f32 %v128
  %v145 = vcvt.s32.f32 %v129
  %v146 = vcvt.s32.f32 %v130
  %v147 = vld [vmem:[%s1] sm:$0xff]
  %v148 = vld [vmem:[%s1 + $0x8] sm:$0xff]
  %v149 = vld [vmem:[%s1 + $0x10] sm:$0xff]
  %v150 = vld [vmem:[%s1 + $0x18] sm:$0xff]
  %v151 = vld [vmem:[%s1 + $0x20] sm:$0xff]
  %v152 = vld [vmem:[%s1 + $0x28] sm:$0xff]
  %v153 = vld [vmem:[%s1 + $0x30] sm:$0xff]
  %v154 = vld [vmem:[%s1 + $0x38] sm:$0xff]
  %v155 = vld [vmem:[%s1 + $0x40] sm:$0xff]
  %v156 = vld [vmem:[%s1 + $0x48] sm:$0xff]
  %v157 = vld [vmem:[%s1 + $0x50] sm:$0xff]
  %v158 = vld [vmem:[%s1 + $0x58] sm:$0xff]
  %v159 = vld [vmem:[%s1 + $0x60] sm:$0xff]
  %v160 = vld [vmem:[%s1 + $0x68] sm:$0xff]
  %v161 = vld [vmem:[%s1 + $0x70] sm:$0xff]
  %v162 = vld [vmem:[%s1 + $0x78] sm:$0xff]
  %163 = vset.pattern.permute.xlu0 0
  %164 = vperm.xlu0 %163, %v147
  %v165 = vpop.permute.xlu0 %164
  %166 = vset.pattern.permute.xlu0 0
  %167 = vperm.xlu0 %166, %v148
  %v168 = vpop.permute.xlu0 %167
  %169 = vset.pattern.permute.xlu0 0
  %170 = vperm.xlu0 %169, %v149
  %v171 = vpop.permute.xlu0 %170
  %172 = vset.pattern.permute.xlu0 0
  %173 = vperm.xlu0 %172, %v150
  %v174 = vpop.permute.xlu0 %173
  %175 = vset.pattern.permute.xlu0 0
  %176 = vperm.xlu0 %175, %v151
  %v177 = vpop.permute.xlu0 %176
  %178 = vset.pattern.permute.xlu0 0
  %179 = vperm.xlu0 %178, %v152
  %v180 = vpop.permute.xlu0 %179
  %181 = vset.pattern.permute.xlu0 0
  %182 = vperm.xlu0 %181, %v153
  %v183 = vpop.permute.xlu0 %182
  %184 = vset.pattern.permute.xlu0 0
  %185 = vperm.xlu0 %184, %v154
  %v186 = vpop.permute.xlu0 %185
  %187 = vset.pattern.permute.xlu0 0
  %188 = vperm.xlu0 %187, %v155
  %v189 = vpop.permute.xlu0 %188
  %190 = vset.pattern.permute.xlu0 0
  %191 = vperm.xlu0 %190, %v156
  %v192 = vpop.permute.xlu0 %191
  %193 = vset.pattern.permute.xlu0 0
  %194 = vperm.xlu0 %193, %v157
  %v195 = vpop.permute.xlu0 %194
  %196 = vset.pattern.permute.xlu0 0
  %197 = vperm.xlu0 %196, %v158
  %v198 = vpop.permute.xlu0 %197
  %199 = vset.pattern.permute.xlu0 0
  %200 = vperm.xlu0 %199, %v159
  %v201 = vpop.permute.xlu0 %200
  %202 = vset.pattern.permute.xlu0 0
  %203 = vperm.xlu0 %202, %v160
  %v204 = vpop.permute.xlu0 %203
  %205 = vset.pattern.permute.xlu0 0
  %206 = vperm.xlu0 %205, %v161
  %v207 = vpop.permute.xlu0 %206
  %208 = vset.pattern.permute.xlu0 0
  %209 = vperm.xlu0 %208, %v162
  %v210 = vpop.permute.xlu0 %209
  %vm211 = vcmp.eq.s32.totalorder %v165, %v50
  %vm212 = vcmp.eq.s32.totalorder %v168, %v50
  %vm213 = vcmp.eq.s32.totalorder %v171, %v50
  %vm214 = vcmp.eq.s32.totalorder %v174, %v50
  %vm215 = vcmp.eq.s32.totalorder %v177, %v50
  %vm216 = vcmp.eq.s32.totalorder %v180, %v50
  %vm217 = vcmp.eq.s32.totalorder %v183, %v50
  %vm218 = vcmp.eq.s32.totalorder %v186, %v50
  %vm219 = vcmp.eq.s32.totalorder %v189, %v50
  %vm220 = vcmp.eq.s32.totalorder %v192, %v50
  %vm221 = vcmp.eq.s32.totalorder %v195, %v50
  %vm222 = vcmp.eq.s32.totalorder %v198, %v50
  %vm223 = vcmp.eq.s32.totalorder %v201, %v50
  %vm224 = vcmp.eq.s32.totalorder %v204, %v50
  %vm225 = vcmp.eq.s32.totalorder %v207, %v50
  %vm226 = vcmp.eq.s32.totalorder %v210, %v50
  %v227 = vsel %vm211, 1, 0
  %v228 = vsel %vm212, 1, 0
  %v229 = vsel %vm213, 1, 0
  %v230 = vsel %vm214, 1, 0
  %v231 = vsel %vm215, 1, 0
  %v232 = vsel %vm216, 1, 0
  %v233 = vsel %vm217, 1, 0
  %v234 = vsel %vm218, 1, 0
  %v235 = vsel %vm219, 1, 0
  %v236 = vsel %vm220, 1, 0
  %v237 = vsel %vm221, 1, 0
  %v238 = vsel %vm222, 1, 0
  %v239 = vsel %vm223, 1, 0
  %v240 = vsel %vm224, 1, 0
  %v241 = vsel %vm225, 1, 0
  %v242 = vsel %vm226, 1, 0
  %v243 = vcvt.s32.f32 %v227
  %v244 = vcvt.s32.f32 %v228
  %v245 = vcvt.s32.f32 %v229
  %v246 = vcvt.s32.f32 %v230
  %v247 = vcvt.s32.f32 %v231
  %v248 = vcvt.s32.f32 %v232
  %v249 = vcvt.s32.f32 %v233
  %v250 = vcvt.s32.f32 %v234
  %v251 = vcvt.s32.f32 %v235
  %v252 = vcvt.s32.f32 %v236
  %v253 = vcvt.s32.f32 %v237
  %v254 = vcvt.s32.f32 %v238
  %v255 = vcvt.s32.f32 %v239
  %v256 = vcvt.s32.f32 %v240
  %v257 = vcvt.s32.f32 %v241
  %v258 = vcvt.s32.f32 %v242
  %v259 = vld [vmem:[%s2] sm:$0xff]
  %v260 = vld [vmem:[%s2 + $0x8] sm:$0xff]
  %v261 = vld [vmem:[%s2 + $0x10] sm:$0xff]
  %v262 = vld [vmem:[%s2 + $0x18] sm:$0xff]
  %v263 = vld [vmem:[%s2 + $0x20] sm:$0xff]
  %v264 = vld [vmem:[%s2 + $0x28] sm:$0xff]
  %v265 = vld [vmem:[%s2 + $0x30] sm:$0xff]
  %v266 = vld [vmem:[%s2 + $0x38] sm:$0xff]
  %vm267 = vcmask 523264
  %v269 = vsel %vm267, %v131, 0
  %v272 = vsel %vm267, %v132, 0
  %v275 = vsel %vm267, %v133, 0
  %v278 = vsel %vm267, %v134, 0
  %v281 = vsel %vm267, %v135, 0
  %v284 = vsel %vm267, %v136, 0
  %v287 = vsel %vm267, %v137, 0
  %v290 = vsel %vm267, %v138, 0
  %v293 = vsel %vm267, %v139, 0
  %v296 = vsel %vm267, %v140, 0
  %v299 = vsel %vm267, %v141, 0
  %v302 = vsel %vm267, %v142, 0
  %v305 = vsel %vm267, %v143, 0
  %v308 = vsel %vm267, %v144, 0
  %v311 = vsel %vm267, %v145, 0
  %v314 = vsel %vm267, %v146, 0
  %316 = vmatprep.subr.mxu0 0.0
  %317 = vmatpush1.msra.mxu0 %v259
  %318 = vmatprep.subr.mxu0 0.0
  %319 = vmatpush1.msra.mxu0 %v260
  %320 = vmatprep.subr.mxu0 0.0
  %321 = vmatpush1.msra.mxu0 %v261
  %322 = vmatprep.subr.mxu0 0.0
  %323 = vmatpush1.msra.mxu0 %v262
  %324 = vmatprep.subr.mxu0 0.0
  %325 = vmatpush1.msra.mxu0 %v263
  %326 = vmatprep.subr.mxu0 0.0
  %327 = vmatpush1.msra.mxu0 %v264
  %328 = vmatprep.subr.mxu0 0.0
  %329 = vmatpush1.msra.mxu0 %v265
  %330 = vmatprep.subr.mxu0 0.0
  %331 = vmatpush1.msra.mxu0 %v266
  %332 = vmatprep.subr.mxu0 0.0
  %333 = vmatpush1.msra.mxu0 0.0
  %334 = vmatprep.subr.mxu0 0.0
  %335 = vmatpush1.msra.mxu0 0.0
  %336 = vmatprep.subr.mxu0 0.0
  %337 = vmatpush1.msra.mxu0 0.0
  %338 = vmatprep.subr.mxu0 0.0
  %339 = vmatpush1.msra.mxu0 0.0
  %340 = vmatprep.subr.mxu0 0.0
  %341 = vmatpush1.msra.mxu0 0.0
  %342 = vmatprep.subr.mxu0 0.0
  %343 = vmatpush1.msra.mxu0 0.0
  %344 = vmatprep.subr.mxu0 0.0
  %345 = vmatpush1.msra.mxu0 0.0
  %346 = vmatprep.subr.mxu0 0.0
  %347 = vmatpush1.msra.mxu0 0.0
  %348 = vmatprep.subr.mxu0 0.0
  %349 = vmatpush1.msra.mxu0 0.0
  %350 = vmatprep.subr.mxu0 0.0
  %351 = vmatpush1.msra.mxu0 0.0
  %352 = vmatprep.subr.mxu0 0.0
  %353 = vmatpush1.msra.mxu0 0.0
  %354 = vmatprep.subr.mxu0 0.0
  %355 = vmatpush1.msra.mxu0 0.0
  %356 = vmatprep.subr.mxu0 0.0
  %357 = vmatpush1.msra.mxu0 0.0
  %358 = vmatprep.subr.mxu0 0.0
  %359 = vmatpush1.msra.mxu0 0.0
  %360 = vmatprep.subr.mxu0 0.0
  %361 = vmatpush1.msra.mxu0 0.0
  %362 = vmatprep.subr.mxu0 0.0
  %363 = vmatpush1.msra.mxu0 0.0
  %364 = vmatprep.subr.mxu0 0.0
  %365 = vmatpush1.msra.mxu0 0.0
  %366 = vmatprep.subr.mxu0 0.0
  %367 = vmatpush1.msra.mxu0 0.0
  %368 = vmatprep.subr.mxu0 0.0
  %369 = vmatpush1.msra.mxu0 0.0
  %370 = vmatprep.subr.mxu0 0.0
  %371 = vmatpush1.msra.mxu0 0.0
  %372 = vmatprep.subr.mxu0 0.0
  %373 = vmatpush1.msra.mxu0 0.0
  %374 = vmatprep.subr.mxu0 0.0
  %375 = vmatpush1.msra.mxu0 0.0
  %376 = vmatprep.subr.mxu0 0.0
  %377 = vmatpush1.msra.mxu0 0.0
  %378 = vmatprep.subr.mxu0 0.0
  %379 = vmatpush1.msra.mxu0 0.0
  %380 = vmatprep.mubr.f32.mxu0 0.0
  %381 = vmatmul.mubr.f32.gmra.mrb[0].mxu0 %v269
  %v382 = vpop.f32.mrb[0].mxu0
  %v383 = vadd.f32 0.0, %v382
  %v384 = vpop.f32.mrb[0].mxu0
  %385 = vmatprep.mubr.f32.mxu0 0.0
  %386 = vmatmul.mubr.f32.gmra.mrb[0].mxu0 %v272
  %v387 = vpop.f32.mrb[0].mxu0
  %v388 = vadd.f32 0.0, %v387
  %v389 = vpop.f32.mrb[0].mxu0
  %390 = vmatprep.mubr.f32.mxu0 0.0
  %391 = vmatmul.mubr.f32.gmra.mrb[0].mxu0 %v275
  %v392 = vpop.f32.mrb[0].mxu0
  %v393 = vadd.f32 0.0, %v392
  %v394 = vpop.f32.mrb[0].mxu0
  %395 = vmatprep.mubr.f32.mxu0 0.0
  %396 = vmatmul.mubr.f32.gmra.mrb[0].mxu0 %v278
  %v397 = vpop.f32.mrb[0].mxu0
  %v398 = vadd.f32 0.0, %v397
  %v399 = vpop.f32.mrb[0].mxu0
  %400 = vmatprep.mubr.f32.mxu0 0.0
  %401 = vmatmul.mubr.f32.gmra.mrb[0].mxu0 %v281
  %v402 = vpop.f32.mrb[0].mxu0
  %v403 = vadd.f32 0.0, %v402
  %v404 = vpop.f32.mrb[0].mxu0
  %405 = vmatprep.mubr.f32.mxu0 0.0
  %406 = vmatmul.mubr.f32.gmra.mrb[0].mxu0 %v284
  %v407 = vpop.f32.mrb[0].mxu0
  %v408 = vadd.f32 0.0, %v407
  %v409 = vpop.f32.mrb[0].mxu0
  %410 = vmatprep.mubr.f32.mxu0 0.0
  %411 = vmatmul.mubr.f32.gmra.mrb[0].mxu0 %v287
  %v412 = vpop.f32.mrb[0].mxu0
  %v413 = vadd.f32 0.0, %v412
  %v414 = vpop.f32.mrb[0].mxu0
  %415 = vmatprep.mubr.f32.mxu0 0.0
  %416 = vmatmul.mubr.f32.gmra.mrb[0].mxu0 %v290
  %v417 = vpop.f32.mrb[0].mxu0
  %v418 = vadd.f32 0.0, %v417
  %v419 = vpop.f32.mrb[0].mxu0
  %420 = vmatprep.mubr.f32.mxu0 0.0
  %421 = vmatmul.mubr.f32.gmra.mrb[0].mxu0 %v293
  %v422 = vpop.f32.mrb[0].mxu0
  %v423 = vadd.f32 0.0, %v422
  %v424 = vpop.f32.mrb[0].mxu0
  %425 = vmatprep.mubr.f32.mxu0 0.0
  %426 = vmatmul.mubr.f32.gmra.mrb[0].mxu0 %v296
  %v427 = vpop.f32.mrb[0].mxu0
  %v428 = vadd.f32 0.0, %v427
  %v429 = vpop.f32.mrb[0].mxu0
  %430 = vmatprep.mubr.f32.mxu0 0.0
  %431 = vmatmul.mubr.f32.gmra.mrb[0].mxu0 %v299
  %v432 = vpop.f32.mrb[0].mxu0
  %v433 = vadd.f32 0.0, %v432
  %v434 = vpop.f32.mrb[0].mxu0
  %435 = vmatprep.mubr.f32.mxu0 0.0
  %436 = vmatmul.mubr.f32.gmra.mrb[0].mxu0 %v302
  %v437 = vpop.f32.mrb[0].mxu0
  %v438 = vadd.f32 0.0, %v437
  %v439 = vpop.f32.mrb[0].mxu0
  %440 = vmatprep.mubr.f32.mxu0 0.0
  %441 = vmatmul.mubr.f32.gmra.mrb[0].mxu0 %v305
  %v442 = vpop.f32.mrb[0].mxu0
  %v443 = vadd.f32 0.0, %v442
  %v444 = vpop.f32.mrb[0].mxu0
  %445 = vmatprep.mubr.f32.mxu0 0.0
  %446 = vmatmul.mubr.f32.gmra.mrb[0].mxu0 %v308
  %v447 = vpop.f32.mrb[0].mxu0
  %v448 = vadd.f32 0.0, %v447
  %v449 = vpop.f32.mrb[0].mxu0
  %450 = vmatprep.mubr.f32.mxu0 0.0
  %451 = vmatmul.mubr.f32.gmra.mrb[0].mxu0 %v311
  %v452 = vpop.f32.mrb[0].mxu0
  %v453 = vadd.f32 0.0, %v452
  %v454 = vpop.f32.mrb[0].mxu0
  %455 = vmatprep.mubr.f32.mxu0 0.0
  %456 = vmatmul.mubr.f32.gmra.mrb[0].mxu0 %v314
  %v457 = vpop.f32.mrb[0].mxu0
  %v458 = vadd.f32 0.0, %v457
  %v459 = vpop.f32.mrb[0].mxu0
  %460 = vdwg.mxu0
  %v461 = vld [vmem:[%s3] sm:$0xff]
  %v462 = vld [vmem:[%s3 + $0x8] sm:$0xff]
  %v463 = vld [vmem:[%s3 + $0x10] sm:$0xff]
  %v464 = vld [vmem:[%s3 + $0x18] sm:$0xff]
  %v465 = vld [vmem:[%s3 + $0x20] sm:$0xff]
  %v466 = vld [vmem:[%s3 + $0x28] sm:$0xff]
  %v467 = vld [vmem:[%s3 + $0x30] sm:$0xff]
  %v468 = vld [vmem:[%s3 + $0x38] sm:$0xff]
  %v469 = vld [vmem:[%s3 + $0x40] sm:$0xff]
  %v470 = vld [vmem:[%s3 + $0x48] sm:$0xff]
  %v471 = vld [vmem:[%s3 + $0x50] sm:$0xff]
  %v472 = vld [vmem:[%s3 + $0x58] sm:$0xff]
  %v473 = vld [vmem:[%s3 + $0x60] sm:$0xff]
  %v474 = vld [vmem:[%s3 + $0x68] sm:$0xff]
  %v475 = vld [vmem:[%s3 + $0x70] sm:$0xff]
  %v476 = vld [vmem:[%s3 + $0x78] sm:$0xff]
  %477 = vmatprep.subr.mxu0 0.0
  %478 = vmatpush1.msra.mxu0 %v461
  %479 = vmatprep.subr.mxu0 0.0
  %480 = vmatpush1.msra.mxu0 %v462
  %481 = vmatprep.subr.mxu0 0.0
  %482 = vmatpush1.msra.mxu0 %v463
  %483 = vmatprep.subr.mxu0 0.0
  %484 = vmatpush1.msra.mxu0 %v464
  %485 = vmatprep.subr.mxu0 0.0
  %486 = vmatpush1.msra.mxu0 %v465
  %487 = vmatprep.subr.mxu0 0.0
  %488 = vmatpush1.msra.mxu0 %v466
  %489 = vmatprep.subr.mxu0 0.0
  %490 = vmatpush1.msra.mxu0 %v467
  %491 = vmatprep.subr.mxu0 0.0
  %492 = vmatpush1.msra.mxu0 %v468
  %493 = vmatprep.subr.mxu0 0.0
  %494 = vmatpush1.msra.mxu0 %v469
  %495 = vmatprep.subr.mxu0 0.0
  %496 = vmatpush1.msra.mxu0 %v470
  %497 = vmatprep.subr.mxu0 0.0
  %498 = vmatpush1.msra.mxu0 %v471
  %499 = vmatprep.subr.mxu0 0.0
  %500 = vmatpush1.msra.mxu0 %v472
  %501 = vmatprep.subr.mxu0 0.0
  %502 = vmatpush1.msra.mxu0 %v473
  %503 = vmatprep.subr.mxu0 0.0
  %504 = vmatpush1.msra.mxu0 %v474
  %505 = vmatprep.subr.mxu0 0.0
  %506 = vmatpush1.msra.mxu0 %v475
  %507 = vmatprep.subr.mxu0 0.0
  %508 = vmatpush1.msra.mxu0 %v476
  %509 = vmatprep.subr.mxu0 0.0
  %510 = vmatpush1.msra.mxu0 0.0
  %511 = vmatprep.subr.mxu0 0.0
  %512 = vmatpush1.msra.mxu0 0.0
  %513 = vmatprep.subr.mxu0 0.0
  %514 = vmatpush1.msra.mxu0 0.0
  %515 = vmatprep.subr.mxu0 0.0
  %516 = vmatpush1.msra.mxu0 0.0
  %517 = vmatprep.subr.mxu0 0.0
  %518 = vmatpush1.msra.mxu0 0.0
  %519 = vmatprep.subr.mxu0 0.0
  %520 = vmatpush1.msra.mxu0 0.0
  %521 = vmatprep.subr.mxu0 0.0
  %522 = vmatpush1.msra.mxu0 0.0
  %523 = vmatprep.subr.mxu0 0.0
  %524 = vmatpush1.msra.mxu0 0.0
  %525 = vmatprep.subr.mxu0 0.0
  %526 = vmatpush1.msra.mxu0 0.0
  %527 = vmatprep.subr.mxu0 0.0
  %528 = vmatpush1.msra.mxu0 0.0
  %529 = vmatprep.subr.mxu0 0.0
  %530 = vmatpush1.msra.mxu0 0.0
  %531 = vmatprep.subr.mxu0 0.0
  %532 = vmatpush1.msra.mxu0 0.0
  %533 = vmatprep.subr.mxu0 0.0
  %534 = vmatpush1.msra.mxu0 0.0
  %535 = vmatprep.subr.mxu0 0.0
  %536 = vmatpush1.msra.mxu0 0.0
  %537 = vmatprep.subr.mxu0 0.0
  %538 = vmatpush1.msra.mxu0 0.0
  %539 = vmatprep.subr.mxu0 0.0
  %540 = vmatpush1.msra.mxu0 0.0
  %541 = vmatprep.mubr.f32.mxu0 0.0
  %542 = vmatmul.mubr.f32.gmra.mrb[0].mxu0 %v243
  %v543 = vpop.f32.mrb[0].mxu0
  %v544 = vadd.f32 0.0, %v543
  %v545 = vpop.f32.mrb[0].mxu0
  %546 = vmatprep.mubr.f32.mxu0 0.0
  %547 = vmatmul.mubr.f32.gmra.mrb[0].mxu0 %v244
  %v548 = vpop.f32.mrb[0].mxu0
  %v549 = vadd.f32 0.0, %v548
  %v550 = vpop.f32.mrb[0].mxu0
  %551 = vmatprep.mubr.f32.mxu0 0.0
  %552 = vmatmul.mubr.f32.gmra.mrb[0].mxu0 %v245
  %v553 = vpop.f32.mrb[0].mxu0
  %v554 = vadd.f32 0.0, %v553
  %v555 = vpop.f32.mrb[0].mxu0
  %556 = vmatprep.mubr.f32.mxu0 0.0
  %557 = vmatmul.mubr.f32.gmra.mrb[0].mxu0 %v246
  %v558 = vpop.f32.mrb[0].mxu0
  %v559 = vadd.f32 0.0, %v558
  %v560 = vpop.f32.mrb[0].mxu0
  %561 = vmatprep.mubr.f32.mxu0 0.0
  %562 = vmatmul.mubr.f32.gmra.mrb[0].mxu0 %v247
  %v563 = vpop.f32.mrb[0].mxu0
  %v564 = vadd.f32 0.0, %v563
  %v565 = vpop.f32.mrb[0].mxu0
  %566 = vmatprep.mubr.f32.mxu0 0.0
  %567 = vmatmul.mubr.f32.gmra.mrb[0].mxu0 %v248
  %v568 = vpop.f32.mrb[0].mxu0
  %v569 = vadd.f32 0.0, %v568
  %v570 = vpop.f32.mrb[0].mxu0
  %571 = vmatprep.mubr.f32.mxu0 0.0
  %572 = vmatmul.mubr.f32.gmra.mrb[0].mxu0 %v249
  %v573 = vpop.f32.mrb[0].mxu0
  %v574 = vadd.f32 0.0, %v573
  %v575 = vpop.f32.mrb[0].mxu0
  %576 = vmatprep.mubr.f32.mxu0 0.0
  %577 = vmatmul.mubr.f32.gmra.mrb[0].mxu0 %v250
  %v578 = vpop.f32.mrb[0].mxu0
  %v579 = vadd.f32 0.0, %v578
  %v580 = vpop.f32.mrb[0].mxu0
  %581 = vmatprep.mubr.f32.mxu0 0.0
  %582 = vmatmul.mubr.f32.gmra.mrb[0].mxu0 %v251
  %v583 = vpop.f32.mrb[0].mxu0
  %v584 = vadd.f32 0.0, %v583
  %v585 = vpop.f32.mrb[0].mxu0
  %586 = vmatprep.mubr.f32.mxu0 0.0
  %587 = vmatmul.mubr.f32.gmra.mrb[0].mxu0 %v252
  %v588 = vpop.f32.mrb[0].mxu0
  %v589 = vadd.f32 0.0, %v588
  %v590 = vpop.f32.mrb[0].mxu0
  %591 = vmatprep.mubr.f32.mxu0 0.0
  %592 = vmatmul.mubr.f32.gmra.mrb[0].mxu0 %v253
  %v593 = vpop.f32.mrb[0].mxu0
  %v594 = vadd.f32 0.0, %v593
  %v595 = vpop.f32.mrb[0].mxu0
  %596 = vmatprep.mubr.f32.mxu0 0.0
  %597 = vmatmul.mubr.f32.gmra.mrb[0].mxu0 %v254
  %v598 = vpop.f32.mrb[0].mxu0
  %v599 = vadd.f32 0.0, %v598
  %v600 = vpop.f32.mrb[0].mxu0
  %601 = vmatprep.mubr.f32.mxu0 0.0
  %602 = vmatmul.mubr.f32.gmra.mrb[0].mxu0 %v255
  %v603 = vpop.f32.mrb[0].mxu0
  %v604 = vadd.f32 0.0, %v603
  %v605 = vpop.f32.mrb[0].mxu0
  %606 = vmatprep.mubr.f32.mxu0 0.0
  %607 = vmatmul.mubr.f32.gmra.mrb[0].mxu0 %v256
  %v608 = vpop.f32.mrb[0].mxu0
  %v609 = vadd.f32 0.0, %v608
  %v610 = vpop.f32.mrb[0].mxu0
  %611 = vmatprep.mubr.f32.mxu0 0.0
  %612 = vmatmul.mubr.f32.gmra.mrb[0].mxu0 %v257
  %v613 = vpop.f32.mrb[0].mxu0
  %v614 = vadd.f32 0.0, %v613
  %v615 = vpop.f32.mrb[0].mxu0
  %616 = vmatprep.mubr.f32.mxu0 0.0
  %617 = vmatmul.mubr.f32.gmra.mrb[0].mxu0 %v258
  %v618 = vpop.f32.mrb[0].mxu0
  %v619 = vadd.f32 0.0, %v618
  %v620 = vpop.f32.mrb[0].mxu0
  %621 = vdwg.mxu0
  %v622 = vld [vmem:[%s4] sm:$0xff]
  %v623 = vld [vmem:[%s4 + $0x8] sm:$0xff]
  %v624 = vld [vmem:[%s4 + $0x10] sm:$0xff]
  %v625 = vld [vmem:[%s4 + $0x18] sm:$0xff]
  %v626 = vld [vmem:[%s5] sm:$0xff]
  %v627 = vld [vmem:[%s5 + $0x8] sm:$0xff]
  %v628 = vld [vmem:[%s5 + $0x10] sm:$0xff]
  %v629 = vld [vmem:[%s5 + $0x18] sm:$0xff]
  %vm630 = vcmask 261120
  %v632 = vsel %vm630, %v544, 0
  %v635 = vsel %vm630, %v549, 0
  %v638 = vsel %vm630, %v554, 0
  %v641 = vsel %vm630, %v559, 0
  %v644 = vsel %vm630, %v564, 0
  %v647 = vsel %vm630, %v569, 0
  %v650 = vsel %vm630, %v574, 0
  %v653 = vsel %vm630, %v579, 0
  %v656 = vsel %vm630, %v584, 0
  %v659 = vsel %vm630, %v589, 0
  %v662 = vsel %vm630, %v594, 0
  %v665 = vsel %vm630, %v599, 0
  %v668 = vsel %vm630, %v604, 0
  %v671 = vsel %vm630, %v609, 0
  %v674 = vsel %vm630, %v614, 0
  %v677 = vsel %vm630, %v619, 0
  %679 = vmatprep.subr.mxu0 0.0
  %680 = vmatpush1.msra.mxu0 %v626
  %681 = vmatprep.subr.mxu0 0.0
  %682 = vmatpush1.msra.mxu0 %v627
  %683 = vmatprep.subr.mxu0 0.0
  %684 = vmatpush1.msra.mxu0 %v628
  %685 = vmatprep.subr.mxu0 0.0
  %686 = vmatpush1.msra.mxu0 %v629
  %687 = vmatprep.subr.mxu0 0.0
  %688 = vmatpush1.msra.mxu0 0.0
  %689 = vmatprep.subr.mxu0 0.0
  %690 = vmatpush1.msra.mxu0 0.0
  %691 = vmatprep.subr.mxu0 0.0
  %692 = vmatpush1.msra.mxu0 0.0
  %693 = vmatprep.subr.mxu0 0.0
  %694 = vmatpush1.msra.mxu0 0.0
  %695 = vmatprep.subr.mxu0 0.0
  %696 = vmatpush1.msra.mxu0 0.0
  %697 = vmatprep.subr.mxu0 0.0
  %698 = vmatpush1.msra.mxu0 0.0
  %699 = vmatprep.subr.mxu0 0.0
  %700 = vmatpush1.msra.mxu0 0.0
  %701 = vmatprep.subr.mxu0 0.0
  %702 = vmatpush1.msra.mxu0 0.0
  %703 = vmatprep.subr.mxu0 0.0
  %704 = vmatpush1.msra.mxu0 0.0
  %705 = vmatprep.subr.mxu0 0.0
  %706 = vmatpush1.msra.mxu0 0.0
  %707 = vmatprep.subr.mxu0 0.0
  %708 = vmatpush1.msra.mxu0 0.0
  %709 = vmatprep.subr.mxu0 0.0
  %710 = vmatpush1.msra.mxu0 0.0
  %711 = vmatprep.subr.mxu0 0.0
  %712 = vmatpush1.msra.mxu0 0.0
  %713 = vmatprep.subr.mxu0 0.0
  %714 = vmatpush1.msra.mxu0 0.0
  %715 = vmatprep.subr.mxu0 0.0
  %716 = vmatpush1.msra.mxu0 0.0
  %717 = vmatprep.subr.mxu0 0.0
  %718 = vmatpush1.msra.mxu0 0.0
  %719 = vmatprep.subr.mxu0 0.0
  %720 = vmatpush1.msra.mxu0 0.0
  %721 = vmatprep.subr.mxu0 0.0
  %722 = vmatpush1.msra.mxu0 0.0
  %723 = vmatprep.subr.mxu0 0.0
  %724 = vmatpush1.msra.mxu0 0.0
  %725 = vmatprep.subr.mxu0 0.0
  %726 = vmatpush1.msra.mxu0 0.0
  %727 = vmatprep.subr.mxu0 0.0
  %728 = vmatpush1.msra.mxu0 0.0
  %729 = vmatprep.subr.mxu0 0.0
  %730 = vmatpush1.msra.mxu0 0.0
  %731 = vmatprep.subr.mxu0 0.0
  %732 = vmatpush1.msra.mxu0 0.0
  %733 = vmatprep.subr.mxu0 0.0
  %734 = vmatpush1.msra.mxu0 0.0
  %735 = vmatprep.subr.mxu0 0.0
  %736 = vmatpush1.msra.mxu0 0.0
  %737 = vmatprep.subr.mxu0 0.0
  %738 = vmatpush1.msra.mxu0 0.0
  %739 = vmatprep.subr.mxu0 0.0
  %740 = vmatpush1.msra.mxu0 0.0
  %741 = vmatprep.subr.mxu0 0.0
  %742 = vmatpush1.msra.mxu0 0.0
  %743 = vmatprep.mubr.f32.mxu0 0.0
  %744 = vmatmul.mubr.f32.gmra.mrb[0].mxu0 %v632
  %v745 = vpop.f32.mrb[0].mxu0
  %v746 = vadd.f32 0.0, %v745
  %v747 = vpop.f32.mrb[0].mxu0
  %748 = vmatprep.mubr.f32.mxu0 0.0
  %749 = vmatmul.mubr.f32.gmra.mrb[0].mxu0 %v635
  %v750 = vpop.f32.mrb[0].mxu0
  %v751 = vadd.f32 0.0, %v750
  %v752 = vpop.f32.mrb[0].mxu0
  %753 = vmatprep.mubr.f32.mxu0 0.0
  %754 = vmatmul.mubr.f32.gmra.mrb[0].mxu0 %v638
  %v755 = vpop.f32.mrb[0].mxu0
  %v756 = vadd.f32 0.0, %v755
  %v757 = vpop.f32.mrb[0].mxu0
  %758 = vmatprep.mubr.f32.mxu0 0.0
  %759 = vmatmul.mubr.f32.gmra.mrb[0].mxu0 %v641
  %v760 = vpop.f32.mrb[0].mxu0
  %v761 = vadd.f32 0.0, %v760
  %v762 = vpop.f32.mrb[0].mxu0
  %763 = vmatprep.mubr.f32.mxu0 0.0
  %764 = vmatmul.mubr.f32.gmra.mrb[0].mxu0 %v644
  %v765 = vpop.f32.mrb[0].mxu0
  %v766 = vadd.f32 0.0, %v765
  %v767 = vpop.f32.mrb[0].mxu0
  %768 = vmatprep.mubr.f32.mxu0 0.0
  %769 = vmatmul.mubr.f32.gmra.mrb[0].mxu0 %v647
  %v770 = vpop.f32.mrb[0].mxu0
  %v771 = vadd.f32 0.0, %v770
  %v772 = vpop.f32.mrb[0].mxu0
  %773 = vmatprep.mubr.f32.mxu0 0.0
  %774 = vmatmul.mubr.f32.gmra.mrb[0].mxu0 %v650
  %v775 = vpop.f32.mrb[0].mxu0
  %v776 = vadd.f32 0.0, %v775
  %v777 = vpop.f32.mrb[0].mxu0
  %778 = vmatprep.mubr.f32.mxu0 0.0
  %779 = vmatmul.mubr.f32.gmra.mrb[0].mxu0 %v653
  %v780 = vpop.f32.mrb[0].mxu0
  %v781 = vadd.f32 0.0, %v780
  %v782 = vpop.f32.mrb[0].mxu0
  %783 = vmatprep.mubr.f32.mxu0 0.0
  %784 = vmatmul.mubr.f32.gmra.mrb[0].mxu0 %v656
  %v785 = vpop.f32.mrb[0].mxu0
  %v786 = vadd.f32 0.0, %v785
  %v787 = vpop.f32.mrb[0].mxu0
  %788 = vmatprep.mubr.f32.mxu0 0.0
  %789 = vmatmul.mubr.f32.gmra.mrb[0].mxu0 %v659
  %v790 = vpop.f32.mrb[0].mxu0
  %v791 = vadd.f32 0.0, %v790
  %v792 = vpop.f32.mrb[0].mxu0
  %793 = vmatprep.mubr.f32.mxu0 0.0
  %794 = vmatmul.mubr.f32.gmra.mrb[0].mxu0 %v662
  %v795 = vpop.f32.mrb[0].mxu0
  %v796 = vadd.f32 0.0, %v795
  %v797 = vpop.f32.mrb[0].mxu0
  %798 = vmatprep.mubr.f32.mxu0 0.0
  %799 = vmatmul.mubr.f32.gmra.mrb[0].mxu0 %v665
  %v800 = vpop.f32.mrb[0].mxu0
  %v801 = vadd.f32 0.0, %v800
  %v802 = vpop.f32.mrb[0].mxu0
  %803 = vmatprep.mubr.f32.mxu0 0.0
  %804 = vmatmul.mubr.f32.gmra.mrb[0].mxu0 %v668
  %v805 = vpop.f32.mrb[0].mxu0
  %v806 = vadd.f32 0.0, %v805
  %v807 = vpop.f32.mrb[0].mxu0
  %808 = vmatprep.mubr.f32.mxu0 0.0
  %809 = vmatmul.mubr.f32.gmra.mrb[0].mxu0 %v671
  %v810 = vpop.f32.mrb[0].mxu0
  %v811 = vadd.f32 0.0, %v810
  %v812 = vpop.f32.mrb[0].mxu0
  %813 = vmatprep.mubr.f32.mxu0 0.0
  %814 = vmatmul.mubr.f32.gmra.mrb[0].mxu0 %v674
  %v815 = vpop.f32.mrb[0].mxu0
  %v816 = vadd.f32 0.0, %v815
  %v817 = vpop.f32.mrb[0].mxu0
  %818 = vmatprep.mubr.f32.mxu0 0.0
  %819 = vmatmul.mubr.f32.gmra.mrb[0].mxu0 %v677
  %v820 = vpop.f32.mrb[0].mxu0
  %v821 = vadd.f32 0.0, %v820
  %v822 = vpop.f32.mrb[0].mxu0
  %823 = vdwg.mxu0
  %v825 = vsel %vm630, %v383, 0
  %v828 = vsel %vm630, %v388, 0
  %v831 = vsel %vm630, %v393, 0
  %v834 = vsel %vm630, %v398, 0
  %v837 = vsel %vm630, %v403, 0
  %v840 = vsel %vm630, %v408, 0
  %v843 = vsel %vm630, %v413, 0
  %v846 = vsel %vm630, %v418, 0
  %v849 = vsel %vm630, %v423, 0
  %v852 = vsel %vm630, %v428, 0
  %v855 = vsel %vm630, %v433, 0
  %v858 = vsel %vm630, %v438, 0
  %v861 = vsel %vm630, %v443, 0
  %v864 = vsel %vm630, %v448, 0
  %v867 = vsel %vm630, %v453, 0
  %v870 = vsel %vm630, %v458, 0
  %872 = vmatprep.subr.mxu0 0.0
  %873 = vmatpush1.msra.mxu0 %v622
  %874 = vmatprep.subr.mxu0 0.0
  %875 = vmatpush1.msra.mxu0 %v623
  %876 = vmatprep.subr.mxu0 0.0
  %877 = vmatpush1.msra.mxu0 %v624
  %878 = vmatprep.subr.mxu0 0.0
  %879 = vmatpush1.msra.mxu0 %v625
  %880 = vmatprep.subr.mxu0 0.0
  %881 = vmatpush1.msra.mxu0 0.0
  %882 = vmatprep.subr.mxu0 0.0
  %883 = vmatpush1.msra.mxu0 0.0
  %884 = vmatprep.subr.mxu0 0.0
  %885 = vmatpush1.msra.mxu0 0.0
  %886 = vmatprep.subr.mxu0 0.0
  %887 = vmatpush1.msra.mxu0 0.0
  %888 = vmatprep.subr.mxu0 0.0
  %889 = vmatpush1.msra.mxu0 0.0
  %890 = vmatprep.subr.mxu0 0.0
  %891 = vmatpush1.msra.mxu0 0.0
  %892 = vmatprep.subr.mxu0 0.0
  %893 = vmatpush1.msra.mxu0 0.0
  %894 = vmatprep.subr.mxu0 0.0
  %895 = vmatpush1.msra.mxu0 0.0
  %896 = vmatprep.subr.mxu0 0.0
  %897 = vmatpush1.msra.mxu0 0.0
  %898 = vmatprep.subr.mxu0 0.0
  %899 = vmatpush1.msra.mxu0 0.0
  %900 = vmatprep.subr.mxu0 0.0
  %901 = vmatpush1.msra.mxu0 0.0
  %902 = vmatprep.subr.mxu0 0.0
  %903 = vmatpush1.msra.mxu0 0.0
  %904 = vmatprep.subr.mxu0 0.0
  %905 = vmatpush1.msra.mxu0 0.0
  %906 = vmatprep.subr.mxu0 0.0
  %907 = vmatpush1.msra.mxu0 0.0
  %908 = vmatprep.subr.mxu0 0.0
  %909 = vmatpush1.msra.mxu0 0.0
  %910 = vmatprep.subr.mxu0 0.0
  %911 = vmatpush1.msra.mxu0 0.0
  %912 = vmatprep.subr.mxu0 0.0
  %913 = vmatpush1.msra.mxu0 0.0
  %914 = vmatprep.subr.mxu0 0.0
  %915 = vmatpush1.msra.mxu0 0.0
  %916 = vmatprep.subr.mxu0 0.0
  %917 = vmatpush1.msra.mxu0 0.0
  %918 = vmatprep.subr.mxu0 0.0
  %919 = vmatpush1.msra.mxu0 0.0
  %920 = vmatprep.subr.mxu0 0.0
  %921 = vmatpush1.msra.mxu0 0.0
  %922 = vmatprep.subr.mxu0 0.0
  %923 = vmatpush1.msra.mxu0 0.0
  %924 = vmatprep.subr.mxu0 0.0
  %925 = vmatpush1.msra.mxu0 0.0
  %926 = vmatprep.subr.mxu0 0.0
  %927 = vmatpush1.msra.mxu0 0.0
  %928 = vmatprep.subr.mxu0 0.0
  %929 = vmatpush1.msra.mxu0 0.0
  %930 = vmatprep.subr.mxu0 0.0
  %931 = vmatpush1.msra.mxu0 0.0
  %932 = vmatprep.subr.mxu0 0.0
  %933 = vmatpush1.msra.mxu0 0.0
  %934 = vmatprep.subr.mxu0 0.0
  %935 = vmatpush1.msra.mxu0 0.0
  %936 = vmatprep.mubr.f32.mxu0 0.0
  %937 = vmatmul.mubr.f32.gmra.mrb[0].mxu0 %v825
  %v938 = vpop.f32.mrb[0].mxu0
  %v939 = vadd.f32 %v746, %v938
  %v940 = vpop.f32.mrb[0].mxu0
  %941 = vmatprep.mubr.f32.mxu0 0.0
  %942 = vmatmul.mubr.f32.gmra.mrb[0].mxu0 %v828
  %v943 = vpop.f32.mrb[0].mxu0
  %v944 = vadd.f32 %v751, %v943
  %v945 = vpop.f32.mrb[0].mxu0
  %946 = vmatprep.mubr.f32.mxu0 0.0
  %947 = vmatmul.mubr.f32.gmra.mrb[0].mxu0 %v831
  %v948 = vpop.f32.mrb[0].mxu0
  %v949 = vadd.f32 %v756, %v948
  %v950 = vpop.f32.mrb[0].mxu0
  %951 = vmatprep.mubr.f32.mxu0 0.0
  %952 = vmatmul.mubr.f32.gmra.mrb[0].mxu0 %v834
  %v953 = vpop.f32.mrb[0].mxu0
  %v954 = vadd.f32 %v761, %v953
  %v955 = vpop.f32.mrb[0].mxu0
  %956 = vmatprep.mubr.f32.mxu0 0.0
  %957 = vmatmul.mubr.f32.gmra.mrb[0].mxu0 %v837
  %v958 = vpop.f32.mrb[0].mxu0
  %v959 = vadd.f32 %v766, %v958
  %v960 = vpop.f32.mrb[0].mxu0
  %961 = vmatprep.mubr.f32.mxu0 0.0
  %962 = vmatmul.mubr.f32.gmra.mrb[0].mxu0 %v840
  %v963 = vpop.f32.mrb[0].mxu0
  %v964 = vadd.f32 %v771, %v963
  %v965 = vpop.f32.mrb[0].mxu0
  %966 = vmatprep.mubr.f32.mxu0 0.0
  %967 = vmatmul.mubr.f32.gmra.mrb[0].mxu0 %v843
  %v968 = vpop.f32.mrb[0].mxu0
  %v969 = vadd.f32 %v776, %v968
  %v970 = vpop.f32.mrb[0].mxu0
  %971 = vmatprep.mubr.f32.mxu0 0.0
  %972 = vmatmul.mubr.f32.gmra.mrb[0].mxu0 %v846
  %v973 = vpop.f32.mrb[0].mxu0
  %v974 = vadd.f32 %v781, %v973
  %v975 = vpop.f32.mrb[0].mxu0
  %976 = vmatprep.mubr.f32.mxu0 0.0
  %977 = vmatmul.mubr.f32.gmra.mrb[0].mxu0 %v849
  %v978 = vpop.f32.mrb[0].mxu0
  %v979 = vadd.f32 %v786, %v978
  %v980 = vpop.f32.mrb[0].mxu0
  %981 = vmatprep.mubr.f32.mxu0 0.0
  %982 = vmatmul.mubr.f32.gmra.mrb[0].mxu0 %v852
  %v983 = vpop.f32.mrb[0].mxu0
  %v984 = vadd.f32 %v791, %v983
  %v985 = vpop.f32.mrb[0].mxu0
  %986 = vmatprep.mubr.f32.mxu0 0.0
  %987 = vmatmul.mubr.f32.gmra.mrb[0].mxu0 %v855
  %v988 = vpop.f32.mrb[0].mxu0
  %v989 = vadd.f32 %v796, %v988
  %v990 = vpop.f32.mrb[0].mxu0
  %991 = vmatprep.mubr.f32.mxu0 0.0
  %992 = vmatmul.mubr.f32.gmra.mrb[0].mxu0 %v858
  %v993 = vpop.f32.mrb[0].mxu0
  %v994 = vadd.f32 %v801, %v993
  %v995 = vpop.f32.mrb[0].mxu0
  %996 = vmatprep.mubr.f32.mxu0 0.0
  %997 = vmatmul.mubr.f32.gmra.mrb[0].mxu0 %v861
  %v998 = vpop.f32.mrb[0].mxu0
  %v999 = vadd.f32 %v806, %v998
  %v1000 = vpop.f32.mrb[0].mxu0
  %1001 = vmatprep.mubr.f32.mxu0 0.0
  %1002 = vmatmul.mubr.f32.gmra.mrb[0].mxu0 %v864
  %v1003 = vpop.f32.mrb[0].mxu0
  %v1004 = vadd.f32 %v811, %v1003
  %v1005 = vpop.f32.mrb[0].mxu0
  %1006 = vmatprep.mubr.f32.mxu0 0.0
  %1007 = vmatmul.mubr.f32.gmra.mrb[0].mxu0 %v867
  %v1008 = vpop.f32.mrb[0].mxu0
  %v1009 = vadd.f32 %v816, %v1008
  %v1010 = vpop.f32.mrb[0].mxu0
  %1011 = vmatprep.mubr.f32.mxu0 0.0
  %1012 = vmatmul.mubr.f32.gmra.mrb[0].mxu0 %v870
  %v1013 = vpop.f32.mrb[0].mxu0
  %v1014 = vadd.f32 %v821, %v1013
  %v1015 = vpop.f32.mrb[0].mxu0
  %1016 = vdwg.mxu0
  %v1017 = vld [vmem:[%s6] sm:$0x1]
  %v1019 = vlaneseq
  %v1020 = vshrl.u32 %v1019, 7
  %v1021 = vsub.s32 0, %v1020
  %v1022 = vrot.slane %v1017, %v1021
  %v1024 = vadd.f32 %v939, %v1022
  %v1025 = vadd.f32 %v944, %v1022
  %v1026 = vadd.f32 %v949, %v1022
  %v1027 = vadd.f32 %v954, %v1022
  %v1028 = vadd.f32 %v959, %v1022
  %v1029 = vadd.f32 %v964, %v1022
  %v1030 = vadd.f32 %v969, %v1022
  %v1031 = vadd.f32 %v974, %v1022
  %v1032 = vadd.f32 %v979, %v1022
  %v1033 = vadd.f32 %v984, %v1022
  %v1034 = vadd.f32 %v989, %v1022
  %v1035 = vadd.f32 %v994, %v1022
  %v1036 = vadd.f32 %v999, %v1022
  %v1037 = vadd.f32 %v1004, %v1022
  %v1038 = vadd.f32 %v1009, %v1022
  %v1039 = vadd.f32 %v1014, %v1022
  %v1040 = vmax.f32 %v1024, 0.0
  %v1041 = vmax.f32 %v1025, 0.0
  %v1042 = vmax.f32 %v1026, 0.0
  %v1043 = vmax.f32 %v1027, 0.0
  %v1044 = vmax.f32 %v1028, 0.0
  %v1045 = vmax.f32 %v1029, 0.0
  %v1046 = vmax.f32 %v1030, 0.0
  %v1047 = vmax.f32 %v1031, 0.0
  %v1048 = vmax.f32 %v1032, 0.0
  %v1049 = vmax.f32 %v1033, 0.0
  %v1050 = vmax.f32 %v1034, 0.0
  %v1051 = vmax.f32 %v1035, 0.0
  %v1052 = vmax.f32 %v1036, 0.0
  %v1053 = vmax.f32 %v1037, 0.0
  %v1054 = vmax.f32 %v1038, 0.0
  %v1055 = vmax.f32 %v1039, 0.0
  %v1056 = vld [vmem:[%s7] sm:$0x1]
  %v1058 = vlaneseq
  %v1059 = vshrl.u32 %v1058, 7
  %v1060 = vsub.s32 0, %v1059
  %v1061 = vrot.slane %v1056, %v1060
  %v1063 = vmul.f32 %v1040, %v1061
  %v1064 = vmul.f32 %v1041, %v1061
  %v1065 = vmul.f32 %v1042, %v1061
  %v1066 = vmul.f32 %v1043, %v1061
  %v1067 = vmul.f32 %v1044, %v1061
  %v1068 = vmul.f32 %v1045, %v1061
  %v1069 = vmul.f32 %v1046, %v1061
  %v1070 = vmul.f32 %v1047, %v1061
  %v1071 = vmul.f32 %v1048, %v1061
  %v1072 = vmul.f32 %v1049, %v1061
  %v1073 = vmul.f32 %v1050, %v1061
  %v1074 = vmul.f32 %v1051, %v1061
  %v1075 = vmul.f32 %v1052, %v1061
  %v1076 = vmul.f32 %v1053, %v1061
  %v1077 = vmul.f32 %v1054, %v1061
  %v1078 = vmul.f32 %v1055, %v1061
  %v1079 = vsel %vm630, %v1063, 0.0
  %1080 = vadd.xlane.f32.xlu0 %v1079
  %v1081 = vpop.xlane.xlu0 %1080
  %v1082 = vsel %vm630, %v1064, 0.0
  %1083 = vadd.xlane.f32.xlu0 %v1082
  %v1084 = vpop.xlane.xlu0 %1083
  %v1085 = vsel %vm630, %v1065, 0.0
  %1086 = vadd.xlane.f32.xlu0 %v1085
  %v1087 = vpop.xlane.xlu0 %1086
  %v1088 = vsel %vm630, %v1066, 0.0
  %1089 = vadd.xlane.f32.xlu0 %v1088
  %v1090 = vpop.xlane.xlu0 %1089
  %v1091 = vsel %vm630, %v1067, 0.0
  %1092 = vadd.xlane.f32.xlu0 %v1091
  %v1093 = vpop.xlane.xlu0 %1092
  %v1094 = vsel %vm630, %v1068, 0.0
  %1095 = vadd.xlane.f32.xlu0 %v1094
  %v1096 = vpop.xlane.xlu0 %1095
  %v1097 = vsel %vm630, %v1069, 0.0
  %1098 = vadd.xlane.f32.xlu0 %v1097
  %v1099 = vpop.xlane.xlu0 %1098
  %v1100 = vsel %vm630, %v1070, 0.0
  %1101 = vadd.xlane.f32.xlu0 %v1100
  %v1102 = vpop.xlane.xlu0 %1101
  %v1103 = vsel %vm630, %v1071, 0.0
  %1104 = vadd.xlane.f32.xlu0 %v1103
  %v1105 = vpop.xlane.xlu0 %1104
  %v1106 = vsel %vm630, %v1072, 0.0
  %1107 = vadd.xlane.f32.xlu0 %v1106
  %v1108 = vpop.xlane.xlu0 %1107
  %v1109 = vsel %vm630, %v1073, 0.0
  %1110 = vadd.xlane.f32.xlu0 %v1109
  %v1111 = vpop.xlane.xlu0 %1110
  %v1112 = vsel %vm630, %v1074, 0.0
  %1113 = vadd.xlane.f32.xlu0 %v1112
  %v1114 = vpop.xlane.xlu0 %1113
  %v1115 = vsel %vm630, %v1075, 0.0
  %1116 = vadd.xlane.f32.xlu0 %v1115
  %v1117 = vpop.xlane.xlu0 %1116
  %v1118 = vsel %vm630, %v1076, 0.0
  %1119 = vadd.xlane.f32.xlu0 %v1118
  %v1120 = vpop.xlane.xlu0 %1119
  %v1121 = vsel %vm630, %v1077, 0.0
  %1122 = vadd.xlane.f32.xlu0 %v1121
  %v1123 = vpop.xlane.xlu0 %1122
  %v1124 = vsel %vm630, %v1078, 0.0
  %1125 = vadd.xlane.f32.xlu0 %v1124
  %v1126 = vpop.xlane.xlu0 %1125
  %v1127 = vadd.f32 %v1024, %v1081
  %v1128 = vadd.f32 %v1025, %v1084
  %v1129 = vadd.f32 %v1026, %v1087
  %v1130 = vadd.f32 %v1027, %v1090
  %v1131 = vadd.f32 %v1028, %v1093
  %v1132 = vadd.f32 %v1029, %v1096
  %v1133 = vadd.f32 %v1030, %v1099
  %v1134 = vadd.f32 %v1031, %v1102
  %v1135 = vadd.f32 %v1032, %v1105
  %v1136 = vadd.f32 %v1033, %v1108
  %v1137 = vadd.f32 %v1034, %v1111
  %v1138 = vadd.f32 %v1035, %v1114
  %v1139 = vadd.f32 %v1036, %v1117
  %v1140 = vadd.f32 %v1037, %v1120
  %v1141 = vadd.f32 %v1038, %v1123
  %v1142 = vadd.f32 %v1039, %v1126
  %s1143 = sld [smem:[#allocation2]]
  %v1144 = vstv %s1143
  %v1145 = vadd.f32 %v1127, %v1144
  %v1146 = vadd.f32 %v1128, %v1144
  %v1147 = vadd.f32 %v1129, %v1144
  %v1148 = vadd.f32 %v1130, %v1144
  %v1149 = vadd.f32 %v1131, %v1144
  %v1150 = vadd.f32 %v1132, %v1144
  %v1151 = vadd.f32 %v1133, %v1144
  %v1152 = vadd.f32 %v1134, %v1144
  %v1153 = vadd.f32 %v1135, %v1144
  %v1154 = vadd.f32 %v1136, %v1144
  %v1155 = vadd.f32 %v1137, %v1144
  %v1156 = vadd.f32 %v1138, %v1144
  %v1157 = vadd.f32 %v1139, %v1144
  %v1158 = vadd.f32 %v1140, %v1144
  %v1159 = vadd.f32 %v1141, %v1144
  %v1160 = vadd.f32 %v1142, %v1144
  %v1161 = vxor.u32 %v1145, 2147483648
  %v1162 = vxor.u32 %v1146, 2147483648
  %v1163 = vxor.u32 %v1147, 2147483648
  %v1164 = vxor.u32 %v1148, 2147483648
  %v1165 = vxor.u32 %v1149, 2147483648
  %v1166 = vxor.u32 %v1150, 2147483648
  %v1167 = vxor.u32 %v1151, 2147483648
  %v1168 = vxor.u32 %v1152, 2147483648
  %v1169 = vxor.u32 %v1153, 2147483648
  %v1170 = vxor.u32 %v1154, 2147483648
  %v1171 = vxor.u32 %v1155, 2147483648
  %v1172 = vxor.u32 %v1156, 2147483648
  %v1173 = vxor.u32 %v1157, 2147483648
  %v1174 = vxor.u32 %v1158, 2147483648
  %v1175 = vxor.u32 %v1159, 2147483648
  %v1176 = vxor.u32 %v1160, 2147483648
  %v1177 = vmul.f32 %v1161, 1.442695
  %v1178 = vpow.pop %v1177
  %v1179 = vmul.f32 %v1162, 1.442695
  %v1180 = vpow.pop %v1179
  %v1181 = vmul.f32 %v1163, 1.442695
  %v1182 = vpow.pop %v1181
  %v1183 = vmul.f32 %v1164, 1.442695
  %v1184 = vpow.pop %v1183
  %v1185 = vmul.f32 %v1165, 1.442695
  %v1186 = vpow.pop %v1185
  %v1187 = vmul.f32 %v1166, 1.442695
  %v1188 = vpow.pop %v1187
  %v1189 = vmul.f32 %v1167, 1.442695
  %v1190 = vpow.pop %v1189
  %v1191 = vmul.f32 %v1168, 1.442695
  %v1192 = vpow.pop %v1191
  %v1193 = vmul.f32 %v1169, 1.442695
  %v1194 = vpow.pop %v1193
  %v1195 = vmul.f32 %v1170, 1.442695
  %v1196 = vpow.pop %v1195
  %v1197 = vmul.f32 %v1171, 1.442695
  %v1198 = vpow.pop %v1197
  %v1199 = vmul.f32 %v1172, 1.442695
  %v1200 = vpow.pop %v1199
  %v1201 = vmul.f32 %v1173, 1.442695
  %v1202 = vpow.pop %v1201
  %v1203 = vmul.f32 %v1174, 1.442695
  %v1204 = vpow.pop %v1203
  %v1205 = vmul.f32 %v1175, 1.442695
  %v1206 = vpow.pop %v1205
  %v1207 = vmul.f32 %v1176, 1.442695
  %v1208 = vpow.pop %v1207
  %v1209 = vadd.f32 %v1178, 1.0
  %v1210 = vadd.f32 %v1180, 1.0
  %v1211 = vadd.f32 %v1182, 1.0
  %v1212 = vadd.f32 %v1184, 1.0
  %v1213 = vadd.f32 %v1186, 1.0
  %v1214 = vadd.f32 %v1188, 1.0
  %v1215 = vadd.f32 %v1190, 1.0
  %v1216 = vadd.f32 %v1192, 1.0
  %v1217 = vadd.f32 %v1194, 1.0
  %v1218 = vadd.f32 %v1196, 1.0
  %v1219 = vadd.f32 %v1198, 1.0
  %v1220 = vadd.f32 %v1200, 1.0
  %v1221 = vadd.f32 %v1202, 1.0
  %v1222 = vadd.f32 %v1204, 1.0
  %v1223 = vadd.f32 %v1206, 1.0
  %v1224 = vadd.f32 %v1208, 1.0
  %v1225 = vrcp.pop %v1209
  %v1226 = vmul.f32 1.0, %v1225
  %v1227 = vrcp.pop %v1210
  %v1228 = vmul.f32 1.0, %v1227
  %v1229 = vrcp.pop %v1211
  %v1230 = vmul.f32 1.0, %v1229
  %v1231 = vrcp.pop %v1212
  %v1232 = vmul.f32 1.0, %v1231
  %v1233 = vrcp.pop %v1213
  %v1234 = vmul.f32 1.0, %v1233
  %v1235 = vrcp.pop %v1214
  %v1236 = vmul.f32 1.0, %v1235
  %v1237 = vrcp.pop %v1215
  %v1238 = vmul.f32 1.0, %v1237
  %v1239 = vrcp.pop %v1216
  %v1240 = vmul.f32 1.0, %v1239
  %v1241 = vrcp.pop %v1217
  %v1242 = vmul.f32 1.0, %v1241
  %v1243 = vrcp.pop %v1218
  %v1244 = vmul.f32 1.0, %v1243
  %v1245 = vrcp.pop %v1219
  %v1246 = vmul.f32 1.0, %v1245
  %v1247 = vrcp.pop %v1220
  %v1248 = vmul.f32 1.0, %v1247
  %v1249 = vrcp.pop %v1221
  %v1250 = vmul.f32 1.0, %v1249
  %v1251 = vrcp.pop %v1222
  %v1252 = vmul.f32 1.0, %v1251
  %v1253 = vrcp.pop %v1223
  %v1254 = vmul.f32 1.0, %v1253
  %v1255 = vrcp.pop %v1224
  %v1256 = vmul.f32 1.0, %v1255
  %1273 = vrot.lane.b32.xlu0 %v1226, 96
  %v1274 = vpop.permute.xlu0 %1273
  %1275 = vrot.lane.b32.xlu0 %v1228, 96
  %v1276 = vpop.permute.xlu0 %1275
  %1277 = vrot.lane.b32.xlu0 %v1230, 96
  %v1278 = vpop.permute.xlu0 %1277
  %1279 = vrot.lane.b32.xlu0 %v1232, 96
  %v1280 = vpop.permute.xlu0 %1279
  %1281 = vrot.lane.b32.xlu0 %v1234, 96
  %v1282 = vpop.permute.xlu0 %1281
  %1283 = vrot.lane.b32.xlu0 %v1236, 96
  %v1284 = vpop.permute.xlu0 %1283
  %1285 = vrot.lane.b32.xlu0 %v1238, 96
  %v1286 = vpop.permute.xlu0 %1285
  %1287 = vrot.lane.b32.xlu0 %v1240, 96
  %v1288 = vpop.permute.xlu0 %1287
  %1289 = vrot.lane.b32.xlu0 %v1242, 96
  %v1290 = vpop.permute.xlu0 %1289
  %1291 = vrot.lane.b32.xlu0 %v1244, 96
  %v1292 = vpop.permute.xlu0 %1291
  %1293 = vrot.lane.b32.xlu0 %v1246, 96
  %v1294 = vpop.permute.xlu0 %1293
  %1295 = vrot.lane.b32.xlu0 %v1248, 96
  %v1296 = vpop.permute.xlu0 %1295
  %1297 = vrot.lane.b32.xlu0 %v1250, 96
  %v1298 = vpop.permute.xlu0 %1297
  %1299 = vrot.lane.b32.xlu0 %v1252, 96
  %v1300 = vpop.permute.xlu0 %1299
  %1301 = vrot.lane.b32.xlu0 %v1254, 96
  %v1302 = vpop.permute.xlu0 %1301
  %1303 = vrot.lane.b32.xlu0 %v1256, 96
  %v1304 = vpop.permute.xlu0 %1303
  %vm1321 = vcmask 7168
  %1322 = vst.msk [vmem:[%s9] sm:$0xff] %vm1321, %v1274
  %1323 = vst.msk [vmem:[%s9 + $0x8] sm:$0xff] %vm1321, %v1276
  %1324 = vst.msk [vmem:[%s9 + $0x10] sm:$0xff] %vm1321, %v1278
  %1325 = vst.msk [vmem:[%s9 + $0x18] sm:$0xff] %vm1321, %v1280
  %1326 = vst.msk [vmem:[%s9 + $0x20] sm:$0xff] %vm1321, %v1282
  %1327 = vst.msk [vmem:[%s9 + $0x28] sm:$0xff] %vm1321, %v1284
  %1328 = vst.msk [vmem:[%s9 + $0x30] sm:$0xff] %vm1321, %v1286
  %1329 = vst.msk [vmem:[%s9 + $0x38] sm:$0xff] %vm1321, %v1288
  %1330 = vst.msk [vmem:[%s9 + $0x40] sm:$0xff] %vm1321, %v1290
  %1331 = vst.msk [vmem:[%s9 + $0x48] sm:$0xff] %vm1321, %v1292
  %1332 = vst.msk [vmem:[%s9 + $0x50] sm:$0xff] %vm1321, %v1294
  %1333 = vst.msk [vmem:[%s9 + $0x58] sm:$0xff] %vm1321, %v1296
  %1334 = vst.msk [vmem:[%s9 + $0x60] sm:$0xff] %vm1321, %v1298
  %1335 = vst.msk [vmem:[%s9 + $0x68] sm:$0xff] %vm1321, %v1300
  %1336 = vst.msk [vmem:[%s9 + $0x70] sm:$0xff] %vm1321, %v1302
  %1337 = vst.msk [vmem:[%s9 + $0x78] sm:$0xff] %vm1321, %v1304
  // Predicated region
  $region38: #{tpu_custom_call.1} parent=0 // pred_check
    _
  $region39: #{tpu_custom_call.1} parent=0 // pred_check_branch
    %1339 = sbr.rel (0) target = $region41
  $region40: #{tpu_custom_call.1} parent=0 // pred_region
    _
  $region41: #{tpu_custom_call.1} parent=0 // pred_fallthru
    _
  // Predicated region
  $region42: #{tpu_custom_call.1} parent=0 // pred_check
    _
  $region43: #{tpu_custom_call.1} parent=0 // pred_check_branch
    %1341 = sbr.rel (0) target = $region45
  $region44: #{tpu_custom_call.1} parent=0 // pred_region
    _
  $region45: #{tpu_custom_call.1} parent=0 // pred_fallthru
    _

</llo_original>
